<compile_context>
chip_gen: v6e
topology: v6e:2x2x1
jax: 0.10.0
libtpu: 0.0.40
codegen_flags: <defaults>
</compile_context>

<pallas_src>
import math

import jax
import jax.numpy as jnp
from jax.experimental import pallas as pl
from jax.experimental.pallas import tpu as pltpu

BN_EPS = 1e-5


def _round_up(n, m):
    return (n + m - 1) // m * m


def _small_layout(n):
    """(Np, tm) for the single-K fused path (used when n <= 2048)."""
    if n <= 128:
        return 128, 128
    np_ = _round_up(n, 256)
    if np_ % 512 == 0 and np_ // 512 >= 2:      # keep >=2 row tiles for v7x 2 TCs
        return np_, 512
    return np_, 256


# ----------------------------- kernels -----------------------------

def _unpack_refs(refs, apply_pre, emit_next, has_acc):
    refs = list(refs)
    a_ref, xs_ref, xi_ref = refs[0], refs[1], refs[2]
    p = 3
    sin_ref = cin_ref = None
    if apply_pre:
        sin_ref, cin_ref = refs[p], refs[p + 1]
        p += 2
    w1_ref, c1_ref, w2_ref, c2_ref = refs[p], refs[p + 1], refs[p + 2], refs[p + 3]
    p += 4
    sout_ref = cout_ref = None
    if emit_next:
        sout_ref, cout_ref = refs[p], refs[p + 1]
        p += 2
    out_ref = refs[p]
    p += 1
    out2_ref = None
    if emit_next:
        out2_ref = refs[p]
        p += 1
    acc_ref = refs[p] if has_acc else None
    return (a_ref, xs_ref, xi_ref, sin_ref, cin_ref, w1_ref, c1_ref,
            w2_ref, c2_ref, sout_ref, cout_ref, out_ref, out2_ref, acc_ref)


def _mlp_epilogue(h, w1_ref, c1_ref, w2_ref, c2_ref):
    # Linear (+ eval-BN folded into W/c) -> ReLU -> Linear, bf16 MXU, f32 accum.
    h = jnp.dot(h.astype(jnp.bfloat16), w1_ref[...],
                preferred_element_type=jnp.float32) + c1_ref[...]
    h = jnp.maximum(h, 0.0)
    h = jnp.dot(h.astype(jnp.bfloat16), w2_ref[...],
                preferred_element_type=jnp.float32) + c2_ref[...]
    return h


def _make_small_kernel(apply_pre, emit_next):
    """Single-K fused GINConv: whole A row-slab + resident features in VMEM."""

    def kernel(*refs):
        (a_ref, xs_ref, xi_ref, sin_ref, cin_ref, w1_ref, c1_ref,
         w2_ref, c2_ref, sout_ref, cout_ref, out_ref, out2_ref,
         _) = _unpack_refs(refs, apply_pre, emit_next, has_acc=False)

        xi = xi_ref[...]                                   # f32 self term
        if apply_pre:                                      # relu(bn1(.)) once
            xi = jnp.maximum(xi * sin_ref[...] + cin_ref[...], 0.0)

        # (1+eps)*x_i + A_i @ x  -- bf16 MXU, exact f32 accumulation.
        h = xi + jnp.dot(a_ref[...], xs_ref[...],
                         preferred_element_type=jnp.float32)
        h = _mlp_epilogue(h, w1_ref, c1_ref, w2_ref, c2_ref)
        out_ref[...] = h.astype(out_ref.dtype)
        if emit_next:
            # Pre-activated bf16 features for the next conv (bn1 + ReLU fused).
            out2_ref[...] = jnp.maximum(
                h * sout_ref[...] + cout_ref[...], 0.0).astype(out2_ref.dtype)

    return kernel


def _make_multik_kernel(apply_pre, emit_next):
    """Gridded GINConv: (rows, k) grid, f32 VMEM accumulator, fused MLP epilogue."""

    def kernel(*refs):
        (a_ref, xs_ref, xi_ref, sin_ref, cin_ref, w1_ref, c1_ref,
         w2_ref, c2_ref, sout_ref, cout_ref, out_ref, out2_ref,
         acc_ref) = _unpack_refs(refs, apply_pre, emit_next, has_acc=True)

        k = pl.program_id(1)

        @pl.when(k == 0)
        def _():
            xi = xi_ref[...]
            if apply_pre:                                  # once per row tile
                xi = jnp.maximum(xi * sin_ref[...] + cin_ref[...], 0.0)
            acc_ref[...] = xi

        # Neighbor aggregation for this source tile: bf16 A @ bf16 x, f32 accum.
        acc_ref[...] += jnp.dot(a_ref[...], xs_ref[...],
                                preferred_element_type=jnp.float32)

        @pl.when(k == pl.num_programs(1) - 1)
        def _():
            h = _mlp_epilogue(acc_ref[...], w1_ref, c1_ref, w2_ref, c2_ref)
            out_ref[...] = h.astype(out_ref.dtype)
            if emit_next:
                out2_ref[...] = jnp.maximum(
                    h * sout_ref[...] + cout_ref[...], 0.0).astype(out2_ref.dtype)

    return kernel


# ----------------------------- pallas_call wrapper -----------------------------

def _gin_conv_call(A, xs, xi, w1, c1, w2, c2, *, pre, nxt, tm, tk, small):
    """One GINConv over the padded graph.

    A  : (Np, Np) bf16 dense adjacency (A[dst, src] = multiplicity)
    xs : (Np, Fin) bf16 aggregation features (pre-activation already applied)
    xi : (Np, Fin) f32 self-term features (pre-affine applied in-kernel if `pre`)
    w1/w2 bf16, c1/c2 f32 (bias + eval-BN folded).
    pre = (s, c) -> self term becomes relu(s*xi + c).
    nxt = (s, c) -> also emit relu(s*out + c) as a bf16 second output.
    """
    Np = A.shape[0]
    Fin = xs.shape[1]
    Fh = w1.shape[1]
    Fo = w2.shape[1]
    apply_pre = pre is not None
    emit_next = nxt is not None

    args = [A, xs, xi]
    if small:
        idx_c = lambda i: (0, 0)
        idx_row = lambda i: (i, 0)
        in_specs = [
            pl.BlockSpec((tm, Np), lambda i: (i, 0)),     # A row slab (bf16)
            pl.BlockSpec((Np, Fin), lambda i: (0, 0)),    # resident features (bf16)
            pl.BlockSpec((tm, Fin), idx_row),             # self features (f32)
        ]
    else:
        idx_c = lambda i, k: (0, 0)
        idx_row = lambda i, k: (i, 0)
        in_specs = [
            pl.BlockSpec((tm, tk), lambda i, k: (i, k)),  # A tile (bf16)
            pl.BlockSpec((tk, Fin), lambda i, k: (k, 0)), # source features (bf16)
            pl.BlockSpec((tm, Fin), idx_row),             # self features (f32)
        ]
    if apply_pre:
        args += [pre[0], pre[1]]
        in_specs += [pl.BlockSpec((1, Fin), idx_c)] * 2
    args += [w1, c1, w2, c2]
    in_specs += [pl.BlockSpec((Fin, Fh), idx_c),
                 pl.BlockSpec((1, Fh), idx_c),
                 pl.BlockSpec((Fh, Fo), idx_c),
                 pl.BlockSpec((1, Fo), idx_c)]
    if emit_next:
        args += [nxt[0], nxt[1]]
        in_specs += [pl.BlockSpec((1, Fo), idx_c)] * 2

    out_shapes = [jax.ShapeDtypeStruct((Np, Fo), jnp.float32)]
    out_specs = [pl.BlockSpec((tm, Fo), idx_row)]
    if emit_next:
        out_shapes.append(jax.ShapeDtypeStruct((Np, Fo), jnp.bfloat16))
        out_specs.append(pl.BlockSpec((tm, Fo), idx_row))

    if small:
        grid = (Np // tm,)
        scratch = []
        dims = ("parallel",)
        kernel = _make_small_kernel(apply_pre, emit_next)
    else:
        grid = (Np // tm, Np // tk)
        scratch = [pltpu.VMEM((tm, Fin), jnp.float32)]
        dims = ("parallel", "arbitrary")
        kernel = _make_multik_kernel(apply_pre, emit_next)
        # NOTE: pipeline_mode=pl.Buffered(3) on the A/xs specs can hide the
        # epilogue burst at k==last if profiling shows a row-tile-boundary stall.

    return pl.pallas_call(
        kernel,
        out_shape=tuple(out_shapes) if emit_next else out_shapes[0],
        grid_spec=pltpu.PrefetchScalarGridSpec(
            num_scalar_prefetch=0,
            grid=grid,
            in_specs=in_specs,
            out_specs=out_specs if emit_next else out_specs[0],
            scratch_shapes=scratch),
        compiler_params=pltpu.CompilerParams(
            dimension_semantics=dims,
            vmem_limit_bytes=48 * 1024 * 1024),
    )(*args)


# ----------------------------- forward -----------------------------

def mygin_forward(x, edge_index, params, num_nodes, force_tiles=None):
    """x: [N, Cin] f32, edge_index: [2, E] int32. Returns (x_out [N, Cout], z [N, H]).

    force_tiles=(tm, tk) forces the gridded multi-K path with those tiles
    (mainly for testing the large-graph kernel at small sizes)."""
    N = num_nodes
    Cin = x.shape[1]

    (w1a, b1a, g0, bt0, rm0, rv0,
     w1b, b1b,
     g1, bt1, rm1, rv1,
     w2a, b2a, g2, bt2, rm2, rv2,
     w2b, b2b) = params

    H = w1b.shape[1]
    Cout = w2b.shape[1]

    # ---- Fold Linear bias + eval-mode BatchNorm into a per-channel affine ----
    # BN(hW + b) = h @ (W*s) + (b*s + beta - rm*s),  s = gamma * rsqrt(rv + eps)
    s0 = g0 * jax.lax.rsqrt(rv0 + BN_EPS)
    w1a_f = w1a * s0
    c1a_f = b1a * s0 + bt0 - rm0 * s0
    s1 = g1 * jax.lax.rsqrt(rv1 + BN_EPS)          # outer bn1 affine
    c1o = bt1 - rm1 * s1
    s2 = g2 * jax.lax.rsqrt(rv2 + BN_EPS)
    w2a_f = w2a * s2
    c2a_f = b2a * s2 + bt2 - rm2 * s2

    # ---- Zero-pad all feature dims to 128 lanes (lane-dense, full MXU) ----
    Cin_p = _round_up(Cin, 128)
    H_p = _round_up(H, 128)
    Cout_p = _round_up(Cout, 128)

    def pad2(a, r, c, dt=jnp.float32):
        a = a.astype(jnp.float32)
        return jnp.pad(a, ((0, r - a.shape[0]), (0, c - a.shape[1]))).astype(dt)

    # MXU weight matrices in bf16 (fast path + half the resident footprint);
    # per-channel affines/biases stay f32 (added to the f32 accumulator).
    w1a_p = pad2(w1a_f, Cin_p, H_p, jnp.bfloat16)
    c1a_p = pad2(c1a_f, 1, H_p)
    w1b_p = pad2(w1b, H_p, H_p, jnp.bfloat16)
    b1b_p = pad2(b1b, 1, H_p)
    s1_p = pad2(s1, 1, H_p)
    c1o_p = pad2(c1o, 1, H_p)
    w2a_p = pad2(w2a_f, H_p, H_p, jnp.bfloat16)
    c2a_p = pad2(c2a_f, 1, H_p)
    w2b_p = pad2(w2b, H_p, Cout_p, jnp.bfloat16)
    b2b_p = pad2(b2b, 1, Cout_p)

    # ---- Layout selection ----
    if force_tiles is not None:
        small = False
        tm, tk = force_tiles
        Np = _round_up(N, (tm * tk) // math.gcd(tm, tk))
    elif N > 2048:
        # Large graphs: 512x1024 bf16 A tiles (1 MiB) sit near the HBM roofline;
        # Np is a multiple of 1024 so the row-tile count stays even for v7x.
        small = False
        tm, tk = 512, 1024
        Np = _round_up(N, 1024)
    else:
        # Small/medium graphs: single K tile -> fully fused 1-D grid, resident
        # feature matrix, no accumulator scratch, no pl.when.
        small = True
        Np, tm = _small_layout(N)
        tk = Np

    # Dense adjacency scattered directly into bf16 (exact for edge
    # multiplicities <= 256); avoids an extra f32 pass over the O(Np^2) buffer.
    src, dst = edge_index[0], edge_index[1]
    A = jnp.zeros((Np, Np), jnp.bfloat16).at[dst, src].add(
        jnp.ones(src.shape, jnp.bfloat16))

    x_f32 = pad2(x, Np, Cin_p)                 # f32 self-term features
    x_bf16 = x_f32.astype(jnp.bfloat16)        # bf16 aggregation operand

    conv_kwargs = dict(tm=tm, tk=tk, small=small)

    # conv0: z = MLP0(x + A@x); also emit x1 = relu(bn1(z)) in bf16 so the bn1
    # affine + ReLU is computed exactly once (not per source tile in conv1).
    z_p, x1_bf16 = _gin_conv_call(A, x_bf16, x_f32,
                                  w1a_p, c1a_p, w1b_p, b1b_p,
                                  pre=None, nxt=(s1_p, c1o_p), **conv_kwargs)

    # conv1: out = MLP1(x1 + A@x1); the f32 self term is derived from z with the
    # bn1 affine applied once per row tile inside the kernel.
    out_p = _gin_conv_call(A, x1_bf16, z_p,
                           w2a_p, c2a_p, w2b_p, b2b_p,
                           pre=(s1_p, c1o_p), nxt=None, **conv_kwargs)

    return out_p[:N, :Cout], z_p[:N, :H]


# ----------------------------- parameters & reference -----------------------------

def init_params(key, in_channels, hidden, out_channels):
    """Deterministic init mimicking PyTorch defaults (Linear: U(-1/sqrt(fan_in), ..))."""
    def linear(k, fan_in, fan_out):
        kw, kb = jax.random.split(k)
        bound = 1.0 / jnp.sqrt(fan_in)
        w = jax.random.uniform(kw, (fan_in, fan_out), jnp.float32, -bound, bound)
        b = jax.random.uniform(kb, (1, fan_out), jnp.float32, -bound, bound)
        return w, b

    def bn(dim):
        # gamma=1, beta=0, running_mean=0, running_var=1 (fresh BatchNorm1d)
        return (jnp.ones((1, dim), jnp.float32), jnp.zeros((1, dim), jnp.float32),
                jnp.zeros((1, dim), jnp.float32), jnp.ones((1, dim), jnp.float32))

    k1, k2, k3, k4 = jax.random.split(key, 4)
    w1a, b1a = linear(k1, in_channels, hidden)
    g0, bt0, rm0, rv0 = bn(hidden)
    w1b, b1b = linear(k2, hidden, hidden)
    g1, bt1, rm1, rv1 = bn(hidden)                 # MYGIN.bn1
    w2a, b2a = linear(k3, hidden, hidden)
    g2, bt2, rm2, rv2 = bn(hidden)
    w2b, b2b = linear(k4, hidden, out_channels)
    return (w1a, b1a, g0, bt0, rm0, rv0,
            w1b, b1b,
            g1, bt1, rm1, rv1,
            w2a, b2a, g2, bt2, rm2, rv2,
            w2b, b2b)


def _bn_ref(h, g, b, rm, rv):
    return (h - rm) * jax.lax.rsqrt(rv + BN_EPS) * g + b


def mygin_reference(x, edge_index, params, num_nodes):
    """Pure-JAX f32 reference for correctness check."""
    N = num_nodes
    src, dst = edge_index[0], edge_index[1]
    A = jnp.zeros((N, N), jnp.float32).at[dst, src].add(1.0)
    (w1a, b1a, g0, bt0, rm0, rv0, w1b, b1b,
     g1, bt1, rm1, rv1, w2a, b2a, g2, bt2, rm2, rv2, w2b, b2b) = params
    h = x + A @ x
    h = jnp.maximum(_bn_ref(h @ w1a + b1a, g0, bt0, rm0, rv0), 0.0)
    h = h @ w1b + b1b
    z = h
    h = jnp.maximum(_bn_ref(h, g1, bt1, rm1, rv1), 0.0)
    h = h + A @ h
    h = jnp.maximum(_bn_ref(h @ w2a + b2a, g2, bt2, rm2, rv2), 0.0)
    h = h @ w2b + b2b
    return h, z


if __name__ == "__main__":
    IN_CH = 8
    HIDDEN = 32
    OUT_CH = 4

    key = jax.random.PRNGKey(0)
    kp, kx1, ks1, kd1, kx2, ks2, kd2 = jax.random.split(key, 7)
    params = init_params(kp, IN_CH, HIDDEN, OUT_CH)

    def make_graph(kx, ks, kd, n, e):
        x = jax.random.normal(kx, (n, IN_CH), jnp.float32)
        edge_index = jnp.stack([
            jax.random.randint(ks, (e,), 0, n, jnp.int32),
            jax.random.randint(kd, (e,), 0, n, jnp.int32),
        ], axis=0)
        return x, edge_index

    def check(x, edge_index, n, force_tiles=None):
        x_out, z = mygin_forward(x, edge_index, params, n, force_tiles=force_tiles)
        jax.block_until_ready((x_out, z))
        x_ref, z_ref = mygin_reference(x, edge_index, params, n)
        assert x_out.shape == (n, OUT_CH) and z.shape == (n, HIDDEN)
        # bf16 operands (A, features, MLP weights) with exact f32 accumulation:
        # tolerances sized for bf16 rounding of intermediates.
        assert jnp.allclose(x_out, x_ref, atol=1e-1, rtol=2e-2), float(
            jnp.max(jnp.abs(x_out - x_ref)))
        assert jnp.allclose(z, z_ref, atol=1e-1, rtol=2e-2), float(
            jnp.max(jnp.abs(z - z_ref)))

    # 1) small-graph fused single-K path (1-D grid, resident features)
    x, ei = make_graph(kx1, ks1, kd1, 16, 32)
    check(x, ei, 16)

    # 2) gridded multi-K path (f32 accumulator + pl.when epilogue), forced tiles
    x2, ei2 = make_graph(kx2, ks2, kd2, 300, 600)
    check(x2, ei2, 300, force_tiles=(128, 128))

    print("KERNEL_OK")
</pallas_src>

<mosaic_0001>
module attributes {stable_mosaic.version = 11 : i64} {
  func.func @kernel(%arg0: i32, %arg1: memref<128x128xbf16, #tpu.memory_space<vmem>>, %arg2: memref<128x128xbf16, #tpu.memory_space<vmem>>, %arg3: memref<128x128xf32, #tpu.memory_space<vmem>>, %arg4: memref<128x128xbf16, #tpu.memory_space<vmem>>, %arg5: memref<1x128xf32, #tpu.memory_space<vmem>>, %arg6: memref<128x128xbf16, #tpu.memory_space<vmem>>, %arg7: memref<1x128xf32, #tpu.memory_space<vmem>>, %arg8: memref<1x128xf32, #tpu.memory_space<vmem>>, %arg9: memref<1x128xf32, #tpu.memory_space<vmem>>, %arg10: memref<128x128xf32, #tpu.memory_space<vmem>>, %arg11: memref<128x128xbf16, #tpu.memory_space<vmem>>) attributes {dimension_semantics = [#tpu.dimension_semantics<parallel>], iteration_bounds = array<i64: 1>, scalar_prefetch = 0 : i64, scratch_operands = 0 : i64, tpu.core_type = #tpu.core_type<tc>, window_params = [{transform_indices = @transform_0, window_bounds = array<i64: 128, 128>}, {pipeline_mode = #tpu.pipeline_mode<synchronous>, transform_indices = @transform_1, window_bounds = array<i64: 128, 128>}, {transform_indices = @transform_2, window_bounds = array<i64: 128, 128>}, {pipeline_mode = #tpu.pipeline_mode<synchronous>, transform_indices = @transform_3, window_bounds = array<i64: 128, 128>}, {pipeline_mode = #tpu.pipeline_mode<synchronous>, transform_indices = @transform_4, window_bounds = array<i64: 1, 128>}, {pipeline_mode = #tpu.pipeline_mode<synchronous>, transform_indices = @transform_5, window_bounds = array<i64: 128, 128>}, {pipeline_mode = #tpu.pipeline_mode<synchronous>, transform_indices = @transform_6, window_bounds = array<i64: 1, 128>}, {pipeline_mode = #tpu.pipeline_mode<synchronous>, transform_indices = @transform_7, window_bounds = array<i64: 1, 128>}, {pipeline_mode = #tpu.pipeline_mode<synchronous>, transform_indices = @transform_8, window_bounds = array<i64: 1, 128>}, {transform_indices = @transform_9, window_bounds = array<i64: 128, 128>}, {transform_indices = @transform_10, window_bounds = array<i64: 128, 128>}]} {
    %c0 = arith.constant 0 : index
    %c0_0 = arith.constant 0 : index
    %0 = vector.load %arg3[%c0, %c0_0] : memref<128x128xf32, #tpu.memory_space<vmem>>, vector<128x128xf32>
    %c0_1 = arith.constant 0 : index
    %c0_2 = arith.constant 0 : index
    %1 = vector.load %arg1[%c0_1, %c0_2] : memref<128x128xbf16, #tpu.memory_space<vmem>>, vector<128x128xbf16>
    %c0_3 = arith.constant 0 : index
    %c0_4 = arith.constant 0 : index
    %2 = vector.load %arg2[%c0_3, %c0_4] : memref<128x128xbf16, #tpu.memory_space<vmem>>, vector<128x128xbf16>
    %cst = arith.constant dense<0.000000e+00> : vector<128x128xf32>
    %3 = tpu.matmul %1, %2, %cst {dimension_numbers = #tpu.dot_dimension_numbers<[1], [0], [0], [1], [0, 0, 1, 1], [], []>} : vector<128x128xbf16>, vector<128x128xbf16>, vector<128x128xf32> -> vector<128x128xf32>
    %4 = arith.addf %0, %3 : vector<128x128xf32>
    %5 = arith.truncf %4 : vector<128x128xf32> to vector<128x128xbf16>
    %c0_5 = arith.constant 0 : index
    %c0_6 = arith.constant 0 : index
    %6 = vector.load %arg4[%c0_5, %c0_6] : memref<128x128xbf16, #tpu.memory_space<vmem>>, vector<128x128xbf16>
    %cst_7 = arith.constant dense<0.000000e+00> : vector<128x128xf32>
    %7 = tpu.matmul %5, %6, %cst_7 {dimension_numbers = #tpu.dot_dimension_numbers<[1], [0], [0], [1], [0, 0, 1, 1], [], []>} : vector<128x128xbf16>, vector<128x128xbf16>, vector<128x128xf32> -> vector<128x128xf32>
    %c0_8 = arith.constant 0 : index
    %c0_9 = arith.constant 0 : index
    %8 = vector.load %arg5[%c0_8, %c0_9] : memref<1x128xf32, #tpu.memory_space<vmem>>, vector<1x128xf32>
    %9 = vector.broadcast %8 : vector<1x128xf32> to vector<128x128xf32>
    %10 = arith.addf %7, %9 : vector<128x128xf32>
    %cst_10 = arith.constant 0.000000e+00 : f32
    %11 = vector.broadcast %cst_10 : f32 to vector<128x128xf32>
    %12 = arith.maximumf %10, %11 : vector<128x128xf32>
    %13 = arith.truncf %12 : vector<128x128xf32> to vector<128x128xbf16>
    %c0_11 = arith.constant 0 : index
    %c0_12 = arith.constant 0 : index
    %14 = vector.load %arg6[%c0_11, %c0_12] : memref<128x128xbf16, #tpu.memory_space<vmem>>, vector<128x128xbf16>
    %cst_13 = arith.constant dense<0.000000e+00> : vector<128x128xf32>
    %15 = tpu.matmul %13, %14, %cst_13 {dimension_numbers = #tpu.dot_dimension_numbers<[1], [0], [0], [1], [0, 0, 1, 1], [], []>} : vector<128x128xbf16>, vector<128x128xbf16>, vector<128x128xf32> -> vector<128x128xf32>
    %c0_14 = arith.constant 0 : index
    %c0_15 = arith.constant 0 : index
    %16 = vector.load %arg7[%c0_14, %c0_15] : memref<1x128xf32, #tpu.memory_space<vmem>>, vector<1x128xf32>
    %17 = vector.broadcast %16 : vector<1x128xf32> to vector<128x128xf32>
    %18 = arith.addf %15, %17 : vector<128x128xf32>
    %c0_16 = arith.constant 0 : index
    %c0_17 = arith.constant 0 : index
    %19 = vector.load %arg10[%c0_16, %c0_17] : memref<128x128xf32, #tpu.memory_space<vmem>>, vector<128x128xf32>
    tpu.vector_store %arg10[%c0_16, %c0_17], %18 {strides = array<i32>} : memref<128x128xf32, #tpu.memory_space<vmem>>, vector<128x128xf32>,
    %c0_18 = arith.constant 0 : index
    %c0_19 = arith.constant 0 : index
    %20 = vector.load %arg8[%c0_18, %c0_19] : memref<1x128xf32, #tpu.memory_space<vmem>>, vector<1x128xf32>
    %21 = vector.broadcast %20 : vector<1x128xf32> to vector<128x128xf32>
    %22 = arith.mulf %18, %21 : vector<128x128xf32>
    %c0_20 = arith.constant 0 : index
    %c0_21 = arith.constant 0 : index
    %23 = vector.load %arg9[%c0_20, %c0_21] : memref<1x128xf32, #tpu.memory_space<vmem>>, vector<1x128xf32>
    %24 = vector.broadcast %23 : vector<1x128xf32> to vector<128x128xf32>
    %25 = arith.addf %22, %24 : vector<128x128xf32>
    %cst_22 = arith.constant 0.000000e+00 : f32
    %26 = vector.broadcast %cst_22 : f32 to vector<128x128xf32>
    %27 = arith.maximumf %25, %26 : vector<128x128xf32>
    %28 = arith.truncf %27 : vector<128x128xf32> to vector<128x128xbf16>
    %c0_23 = arith.constant 0 : index
    %c0_24 = arith.constant 0 : index
    %29 = vector.load %arg11[%c0_23, %c0_24] : memref<128x128xbf16, #tpu.memory_space<vmem>>, vector<128x128xbf16>
    tpu.vector_store %arg11[%c0_23, %c0_24], %28 {strides = array<i32>} : memref<128x128xbf16, #tpu.memory_space<vmem>>, vector<128x128xbf16>,
    return
  }
  func.func @transform_0(%arg0: i32) -> (i32, i32) {
    %c0_i32 = arith.constant 0 : i32
    %c0_i32_0 = arith.constant 0 : i32
    return %arg0, %c0_i32 : i32, i32
  }
  func.func @transform_1(%arg0: i32) -> (i32, i32) {
    %c0_i32 = arith.constant 0 : i32
    %c0_i32_0 = arith.constant 0 : i32
    %c0_i32_1 = arith.constant 0 : i32
    return %c0_i32, %c0_i32_0 : i32, i32
  }
  func.func @transform_2(%arg0: i32) -> (i32, i32) {
    %c0_i32 = arith.constant 0 : i32
    %c0_i32_0 = arith.constant 0 : i32
    return %arg0, %c0_i32 : i32, i32
  }
  func.func @transform_3(%arg0: i32) -> (i32, i32) {
    %c0_i32 = arith.constant 0 : i32
    %c0_i32_0 = arith.constant 0 : i32
    %c0_i32_1 = arith.constant 0 : i32
    return %c0_i32, %c0_i32_0 : i32, i32
  }
  func.func @transform_4(%arg0: i32) -> (i32, i32) {
    %c0_i32 = arith.constant 0 : i32
    %c0_i32_0 = arith.constant 0 : i32
    %c0_i32_1 = arith.constant 0 : i32
    return %c0_i32, %c0_i32_0 : i32, i32
  }
  func.func @transform_5(%arg0: i32) -> (i32, i32) {
    %c0_i32 = arith.constant 0 : i32
    %c0_i32_0 = arith.constant 0 : i32
    %c0_i32_1 = arith.constant 0 : i32
    return %c0_i32, %c0_i32_0 : i32, i32
  }
  func.func @transform_6(%arg0: i32) -> (i32, i32) {
    %c0_i32 = arith.constant 0 : i32
    %c0_i32_0 = arith.constant 0 : i32
    %c0_i32_1 = arith.constant 0 : i32
    return %c0_i32, %c0_i32_0 : i32, i32
  }
  func.func @transform_7(%arg0: i32) -> (i32, i32) {
    %c0_i32 = arith.constant 0 : i32
    %c0_i32_0 = arith.constant 0 : i32
    %c0_i32_1 = arith.constant 0 : i32
    return %c0_i32, %c0_i32_0 : i32, i32
  }
  func.func @transform_8(%arg0: i32) -> (i32, i32) {
    %c0_i32 = arith.constant 0 : i32
    %c0_i32_0 = arith.constant 0 : i32
    %c0_i32_1 = arith.constant 0 : i32
    return %c0_i32, %c0_i32_0 : i32, i32
  }
  func.func @transform_9(%arg0: i32) -> (i32, i32) {
    %c0_i32 = arith.constant 0 : i32
    %c0_i32_0 = arith.constant 0 : i32
    return %arg0, %c0_i32 : i32, i32
  }
  func.func @transform_10(%arg0: i32) -> (i32, i32) {
    %c0_i32 = arith.constant 0 : i32
    %c0_i32_0 = arith.constant 0 : i32
    return %arg0, %c0_i32 : i32, i32
  }
}

</mosaic_0001>

<llo_original>
// kernel: tpu_custom_call.1
$region0: #{tpu_custom_call.1}
  #allocation0 [shape = 'u32[]', space=smem, size = 0x4, offset = 0x4, fixed_abs, tag = 'smem constant byte address 0x4 - core index']
  #allocation1 [shape = 'u32[144,128]{1,0:T(1,128)}', space=vmem, size = 0x12000, scoped, tag = 'internal scratch']
  %s0 = inlined_call_operand.hbm [shape: bf16[128,128], index: 0, kind: input, shape index: {}]
  %s1 = inlined_call_operand.hbm [shape: bf16[128,128], index: 1, kind: input, shape index: {}]
  %s2 = inlined_call_operand.hbm [shape: f32[128,128], index: 2, kind: input, shape index: {}]
  %s3 = inlined_call_operand.hbm [shape: bf16[128,128], index: 3, kind: input, shape index: {}]
  %s4 = inlined_call_operand.vmem [shape: f32[1,128], index: 4, kind: input, shape index: {}]
  %s5 = inlined_call_operand.hbm [shape: bf16[128,128], index: 5, kind: input, shape index: {}]
  %s6 = inlined_call_operand.vmem [shape: f32[1,128], index: 6, kind: input, shape index: {}]
  %s7 = inlined_call_operand.vmem [shape: f32[1,128], index: 7, kind: input, shape index: {}]
  %s8 = inlined_call_operand.vmem [shape: f32[1,128], index: 8, kind: input, shape index: {}]
  %s9 = inlined_call_operand.hbm [shape: f32[128,128], index: 9, kind: output, shape index: {0}]
  %s10 = inlined_call_operand.hbm [shape: bf16[128,128], index: 10, kind: output, shape index: {1}]
  %11 = xla_tuple %s9, %s10
  %s12 = sld [smem:[#allocation0]]
  $region74: #{tpu_custom_call.1} parent=0
    _
  %s14 = ssub.s32 1, %s12
  %s15 = scalar_select 0, %s14, %s12
  $region1: #{tpu_custom_call.1} parent=0
    #allocation2 [shape = 'u8[32768]{0}', space=vmem, size = 0x8000, scoped, tag = 'input window, operand 0, single buffered']
    #allocation3 [shape = 's32[1]{0}', space=sflag, size = 0x4, scoped, tag = 'scoped memory for tpu_custom_call.1']
    #allocation4 [shape = 's32[1]{0}', space=sflag, size = 0x4, scoped, tag = 'scoped memory for tpu_custom_call.1']
    #allocation5 [shape = 'u8[32768]{0}', space=vmem, size = 0x8000, scoped, tag = 'input window, operand 1, single buffered']
    #allocation6 [shape = 's32[1]{0}', space=sflag, size = 0x4, scoped, tag = 'scoped memory for tpu_custom_call.1']
    #allocation7 [shape = 'u8[65536]{0}', space=vmem, size = 0x10000, scoped, tag = 'input window, operand 2, single buffered']
    #allocation8 [shape = 'u8[32768]{0}', space=vmem, size = 0x8000, scoped, tag = 'input window, operand 3, single buffered']
    #allocation9 [shape = 's32[1]{0}', space=sflag, size = 0x4, scoped, tag = 'scoped memory for tpu_custom_call.1']
    #allocation10 [shape = 'u8[32768]{0}', space=vmem, size = 0x8000, scoped, tag = 'input window, operand 5, single buffered']
    #allocation11 [shape = 'u8[65536]{0}', space=vmem, size = 0x10000, scoped, tag = 'output window, operand 0, single buffered']
    #allocation12 [shape = 'u8[32768]{0}', space=vmem, size = 0x8000, scoped, tag = 'output window, operand 1, single buffered']
    #allocation13 [shape = 's32[1]{0}', space=sflag, size = 0x4, scoped, tag = 'scoped memory for tpu_custom_call.1']
    %16 = vsyncpa [#allocation3], 0
    %17 = vsyncpa [#allocation6], 0
    %18 = vsyncpa [#allocation9], 0
    %19 = vsyncpa [#allocation4], 0
    %20 = vsyncpa [#allocation13], 0
    // Predicated region
    $region2: #{tpu_custom_call.1} parent=1 // pred_check
      _
    $region3: #{tpu_custom_call.1} parent=1 // pred_check_branch
      %22 = sbr.rel (0) target = $region5
    $region4: #{tpu_custom_call.1} parent=1 // pred_region
      %s24 = ssub.s32 1024, 1024
      %25 = vsyncadd [#allocation3], %s24
      %s26 = sshll.u32 [#allocation2], 4
      %s27 = int_to_ptr.vmem [resolvable:$true] %s26
      %32 = dma.hbm_to_vmem [thread:$0]  %s0, 1024, %s27, [#allocation3], 64, 64, 4
    $region5: #{tpu_custom_call.1} parent=1 // pred_fallthru
      _
    // Predicated region
    $region6: #{tpu_custom_call.1} parent=1 // pred_check
      _
    $region7: #{tpu_custom_call.1} parent=1 // pred_check_branch
      %34 = sbr.rel (0) target = $region9
    $region8: #{tpu_custom_call.1} parent=1 // pred_region
      %s36 = ssub.s32 1024, 1024
      %37 = vsyncadd [#allocation6], %s36
      %s38 = sshll.u32 [#allocation5], 4
      %s39 = int_to_ptr.vmem [resolvable:$true] %s38
      %44 = dma.hbm_to_vmem [thread:$0]  %s1, 1024, %s39, [#allocation6], 64, 64, 4
    $region9: #{tpu_custom_call.1} parent=1 // pred_fallthru
      _
    // Predicated region
    $region10: #{tpu_custom_call.1} parent=1 // pred_check
      _
    $region11: #{tpu_custom_call.1} parent=1 // pred_check_branch
      %46 = sbr.rel (0) target = $region13
    $region12: #{tpu_custom_call.1} parent=1 // pred_region
      %s48 = ssub.s32 2048, 2048
      %49 = vsyncadd [#allocation6], %s48
      %s50 = sshll.u32 [#allocation7], 4
      %s51 = int_to_ptr.vmem [resolvable:$true] %s50
      %56 = dma.hbm_to_vmem [thread:$0]  %s2, 2048, %s51, [#allocation6], 128, 128, 8
    $region13: #{tpu_custom_call.1} parent=1 // pred_fallthru
      _
    // Predicated region
    $region14: #{tpu_custom_call.1} parent=1 // pred_check
      _
    $region15: #{tpu_custom_call.1} parent=1 // pred_check_branch
      %58 = sbr.rel (0) target = $region17
    $region16: #{tpu_custom_call.1} parent=1 // pred_region
      %s60 = ssub.s32 1024, 1024
      %61 = vsyncadd [#allocation9], %s60
      %s62 = sshll.u32 [#allocation8], 4
      %s63 = int_to_ptr.vmem [resolvable:$true] %s62
      %68 = dma.hbm_to_vmem [thread:$0]  %s3, 1024, %s63, [#allocation9], 64, 64, 4
    $region17: #{tpu_custom_call.1} parent=1 // pred_fallthru
      _
    // Predicated region
    $region18: #{tpu_custom_call.1} parent=1 // pred_check
      _
    $region19: #{tpu_custom_call.1} parent=1 // pred_check_branch
      %70 = sbr.rel (0) target = $region21
    $region20: #{tpu_custom_call.1} parent=1 // pred_region
      _
    $region21: #{tpu_custom_call.1} parent=1 // pred_fallthru
      _
    // Predicated region
    $region22: #{tpu_custom_call.1} parent=1 // pred_check
      _
    $region23: #{tpu_custom_call.1} parent=1 // pred_check_branch
      %72 = sbr.rel (0) target = $region25
    $region24: #{tpu_custom_call.1} parent=1 // pred_region
      %s74 = ssub.s32 1024, 1024
      %75 = vsyncadd [#allocation9], %s74
      %s76 = sshll.u32 [#allocation10], 4
      %s77 = int_to_ptr.vmem [resolvable:$true] %s76
      %82 = dma.hbm_to_vmem [thread:$0]  %s5, 1024, %s77, [#allocation9], 64, 64, 4
    $region25: #{tpu_custom_call.1} parent=1 // pred_fallthru
      _
    // Predicated region
    $region26: #{tpu_custom_call.1} parent=1 // pred_check
      _
    $region27: #{tpu_custom_call.1} parent=1 // pred_check_branch
      %84 = sbr.rel (0) target = $region29
    $region28: #{tpu_custom_call.1} parent=1 // pred_region
      _
    $region29: #{tpu_custom_call.1} parent=1 // pred_fallthru
      _
    // Predicated region
    $region30: #{tpu_custom_call.1} parent=1 // pred_check
      _
    $region31: #{tpu_custom_call.1} parent=1 // pred_check_branch
      %86 = sbr.rel (0) target = $region33
    $region32: #{tpu_custom_call.1} parent=1 // pred_region
      _
    $region33: #{tpu_custom_call.1} parent=1 // pred_fallthru
      _
    // Predicated region
    $region34: #{tpu_custom_call.1} parent=1 // pred_check
      _
    $region35: #{tpu_custom_call.1} parent=1 // pred_check_branch
      %88 = sbr.rel (0) target = $region37
    $region36: #{tpu_custom_call.1} parent=1 // pred_region
      _
    $region37: #{tpu_custom_call.1} parent=1 // pred_fallthru
      _
    // Predicated region
    $region38: #{tpu_custom_call.1} parent=1 // pred_check
      _
    $region39: #{tpu_custom_call.1} parent=1 // pred_check_branch
      %90 = sbr.rel (0) target = $region41
    $region40: #{tpu_custom_call.1} parent=1 // pred_region
      %91 = dma.done [#allocation3], 1024
    $region41: #{tpu_custom_call.1} parent=1 // pred_fallthru
      _
    // Predicated region
    $region42: #{tpu_custom_call.1} parent=1 // pred_check
      _
    $region43: #{tpu_custom_call.1} parent=1 // pred_check_branch
      %93 = sbr.rel (0) target = $region45
    $region44: #{tpu_custom_call.1} parent=1 // pred_region
      %94 = dma.done [#allocation6], 1024
    $region45: #{tpu_custom_call.1} parent=1 // pred_fallthru
      _
    // Predicated region
    $region46: #{tpu_custom_call.1} parent=1 // pred_check
      _
    $region47: #{tpu_custom_call.1} parent=1 // pred_check_branch
      %96 = sbr.rel (0) target = $region49
    $region48: #{tpu_custom_call.1} parent=1 // pred_region
      %97 = dma.done [#allocation6], 2048
    $region49: #{tpu_custom_call.1} parent=1 // pred_fallthru
      _
    // Predicated region
    $region50: #{tpu_custom_call.1} parent=1 // pred_check
      _
    $region51: #{tpu_custom_call.1} parent=1 // pred_check_branch
      %99 = sbr.rel (0) target = $region53
    $region52: #{tpu_custom_call.1} parent=1 // pred_region
      %100 = dma.done [#allocation9], 1024
    $region53: #{tpu_custom_call.1} parent=1 // pred_fallthru
      _
    // Predicated region
    $region54: #{tpu_custom_call.1} parent=1 // pred_check
      _
    $region55: #{tpu_custom_call.1} parent=1 // pred_check_branch
      %102 = sbr.rel (0) target = $region57
    $region56: #{tpu_custom_call.1} parent=1 // pred_region
      %103 = dma.done [#allocation9], 1024
    $region57: #{tpu_custom_call.1} parent=1 // pred_fallthru
      _
    %v105 = vld [vmem:[#allocation7] sm:$0xff]
    %v106 = vld [vmem:[#allocation7 + $0x8] sm:$0xff]
    %v107 = vld [vmem:[#allocation7 + $0x10] sm:$0xff]
    %v108 = vld [vmem:[#allocation7 + $0x18] sm:$0xff]
    %v109 = vld [vmem:[#allocation7 + $0x20] sm:$0xff]
    %v110 = vld [vmem:[#allocation7 + $0x28] sm:$0xff]
    %v111 = vld [vmem:[#allocation7 + $0x30] sm:$0xff]
    %v112 = vld [vmem:[#allocation7 + $0x38] sm:$0xff]
    %v113 = vld [vmem:[#allocation7 + $0x40] sm:$0xff]
    %v114 = vld [vmem:[#allocation7 + $0x48] sm:$0xff]
    %v115 = vld [vmem:[#allocation7 + $0x50] sm:$0xff]
    %v116 = vld [vmem:[#allocation7 + $0x58] sm:$0xff]
    %v117 = vld [vmem:[#allocation7 + $0x60] sm:$0xff]
    %v118 = vld [vmem:[#allocation7 + $0x68] sm:$0xff]
    %v119 = vld [vmem:[#allocation7 + $0x70] sm:$0xff]
    %v120 = vld [vmem:[#allocation7 + $0x78] sm:$0xff]
    %v121 = vld [vmem:[#allocation2] sm:$0xf]
    %v122 = vld [vmem:[#allocation2 + $0x4] sm:$0xf]
    %v123 = vld [vmem:[#allocation2 + $0x8] sm:$0xf]
    %v124 = vld [vmem:[#allocation2 + $0xc] sm:$0xf]
    %v125 = vld [vmem:[#allocation2 + $0x10] sm:$0xf]
    %v126 = vld [vmem:[#allocation2 + $0x14] sm:$0xf]
    %v127 = vld [vmem:[#allocation2 + $0x18] sm:$0xf]
    %v128 = vld [vmem:[#allocation2 + $0x1c] sm:$0xf]
    %v129 = vld [vmem:[#allocation2 + $0x20] sm:$0xf]
    %v130 = vld [vmem:[#allocation2 + $0x24] sm:$0xf]
    %v131 = vld [vmem:[#allocation2 + $0x28] sm:$0xf]
    %v132 = vld [vmem:[#allocation2 + $0x2c] sm:$0xf]
    %v133 = vld [vmem:[#allocation2 + $0x30] sm:$0xf]
    %v134 = vld [vmem:[#allocation2 + $0x34] sm:$0xf]
    %v135 = vld [vmem:[#allocation2 + $0x38] sm:$0xf]
    %v136 = vld [vmem:[#allocation2 + $0x3c] sm:$0xf]
    %v137 = vld [vmem:[#allocation5] sm:$0xf]
    %v138 = vld [vmem:[#allocation5 + $0x4] sm:$0xf]
    %v139 = vld [vmem:[#allocation5 + $0x8] sm:$0xf]
    %v140 = vld [vmem:[#allocation5 + $0xc] sm:$0xf]
    %v141 = vld [vmem:[#allocation5 + $0x10] sm:$0xf]
    %v142 = vld [vmem:[#allocation5 + $0x14] sm:$0xf]
    %v143 = vld [vmem:[#allocation5 + $0x18] sm:$0xf]
    %v144 = vld [vmem:[#allocation5 + $0x1c] sm:$0xf]
    %v145 = vld [vmem:[#allocation5 + $0x20] sm:$0xf]
    %v146 = vld [vmem:[#allocation5 + $0x24] sm:$0xf]
    %v147 = vld [vmem:[#allocation5 + $0x28] sm:$0xf]
    %v148 = vld [vmem:[#allocation5 + $0x2c] sm:$0xf]
    %v149 = vld [vmem:[#allocation5 + $0x30] sm:$0xf]
    %v150 = vld [vmem:[#allocation5 + $0x34] sm:$0xf]
    %v151 = vld [vmem:[#allocation5 + $0x38] sm:$0xf]
    %v152 = vld [vmem:[#allocation5 + $0x3c] sm:$0xf]
    %v169 = vunpack.c.l.b16 %v121
    %v170 = vunpack.c.l.b16 %v122
    %v171 = vunpack.c.l.b16 %v123
    %v172 = vunpack.c.l.b16 %v124
    %v173 = vunpack.c.l.b16 %v125
    %v174 = vunpack.c.l.b16 %v126
    %v175 = vunpack.c.l.b16 %v127
    %v176 = vunpack.c.l.b16 %v128
    %v177 = vunpack.c.l.b16 %v129
    %v178 = vunpack.c.l.b16 %v130
    %v179 = vunpack.c.l.b16 %v131
    %v180 = vunpack.c.l.b16 %v132
    %v181 = vunpack.c.l.b16 %v133
    %v182 = vunpack.c.l.b16 %v134
    %v183 = vunpack.c.l.b16 %v135
    %v184 = vunpack.c.l.b16 %v136
    %v185 = vpack.c.b16 %v170, %v169
    %v186 = vpack.c.b16 %v172, %v171
    %v187 = vpack.c.b16 %v174, %v173
    %v188 = vpack.c.b16 %v176, %v175
    %v189 = vpack.c.b16 %v178, %v177
    %v190 = vpack.c.b16 %v180, %v179
    %v191 = vpack.c.b16 %v182, %v181
    %v192 = vpack.c.b16 %v184, %v183
    %v217 = vunpack.c.l.b16 %v137
    %v218 = vunpack.c.l.b16 %v138
    %v219 = vunpack.c.l.b16 %v139
    %v220 = vunpack.c.l.b16 %v140
    %v221 = vunpack.c.l.b16 %v141
    %v222 = vunpack.c.l.b16 %v142
    %v223 = vunpack.c.l.b16 %v143
    %v224 = vunpack.c.l.b16 %v144
    %v225 = vunpack.c.l.b16 %v145
    %v226 = vunpack.c.l.b16 %v146
    %v227 = vunpack.c.l.b16 %v147
    %v228 = vunpack.c.l.b16 %v148
    %v229 = vunpack.c.l.b16 %v149
    %v230 = vunpack.c.l.b16 %v150
    %v231 = vunpack.c.l.b16 %v151
    %v232 = vunpack.c.l.b16 %v152
    %v233 = vpack.c.b16 %v218, %v217
    %v234 = vpack.c.b16 %v220, %v219
    %v235 = vpack.c.b16 %v222, %v221
    %v236 = vpack.c.b16 %v224, %v223
    %v237 = vpack.c.b16 %v226, %v225
    %v238 = vpack.c.b16 %v228, %v227
    %v239 = vpack.c.b16 %v230, %v229
    %v240 = vpack.c.b16 %v232, %v231
    %249 = vmatprep.subr.bf16.mxu0 0
    %250 = vmatpush1.bf16.msra.mxu0 %v240
    %251 = vmatprep.subr.bf16.mxu0 0
    %252 = vmatpush1.bf16.msra.mxu0 %v239
    %253 = vmatprep.subr.bf16.mxu0 0
    %254 = vmatpush1.bf16.msra.mxu0 %v238
    %255 = vmatprep.subr.bf16.mxu0 0
    %256 = vmatpush1.bf16.msra.mxu0 %v237
    %257 = vmatprep.subr.bf16.mxu0 0
    %258 = vmatpush1.bf16.msra.mxu0 %v236
    %259 = vmatprep.subr.bf16.mxu0 0
    %260 = vmatpush1.bf16.msra.mxu0 %v235
    %261 = vmatprep.subr.bf16.mxu0 0
    %262 = vmatpush1.bf16.msra.mxu0 %v234
    %263 = vmatprep.subr.bf16.mxu0 0
    %264 = vmatpush1.bf16.msra.mxu0 %v233
    %265 = vmatprep.subr.bf16.mxu0 0
    %266 = vmatpush2.bf16.msra.mxu0 0
    %267 = vmatprep.subr.bf16.mxu0 0
    %268 = vmatpush2.bf16.msra.mxu0 0
    %269 = vmatprep.subr.bf16.mxu0 0
    %270 = vmatpush2.bf16.msra.mxu0 0
    %271 = vmatprep.subr.bf16.mxu0 0
    %272 = vmatpush2.bf16.msra.mxu0 0
    %273 = vmatprep.subr.bf16.mxu0 0
    %274 = vmatpush2.bf16.msra.mxu0 0
    %275 = vmatprep.subr.bf16.mxu0 0
    %276 = vmatpush2.bf16.msra.mxu0 0
    %277 = vmatprep.subr.bf16.mxu0 0
    %278 = vmatpush2.bf16.msra.mxu0 0
    %279 = vmatprep.subr.bf16.mxu0 0
    %280 = vmatpush2.bf16.msra.mxu0 0
    %281 = vmatprep.mubr.bf16.mxu0 0
    %282 = vmatmul.mubr.bf16.gmra.mxu0 %v185
    %v283 = vpop.f32.mrf.mxu0
    %v284 = vadd.f32 0.0, %v283
    %v285 = vpop.f32.mrf.mxu0
    %v286 = vpop.f32.mrf.mxu0
    %v287 = vadd.f32 0.0, %v286
    %v288 = vpop.f32.mrf.mxu0
    %289 = vmatprep.mubr.bf16.mxu0 0
    %290 = vmatmul.mubr.bf16.gmra.mxu0 %v186
    %v291 = vpop.f32.mrf.mxu0
    %v292 = vadd.f32 0.0, %v291
    %v293 = vpop.f32.mrf.mxu0
    %v294 = vpop.f32.mrf.mxu0
    %v295 = vadd.f32 0.0, %v294
    %v296 = vpop.f32.mrf.mxu0
    %297 = vmatprep.mubr.bf16.mxu0 0
    %298 = vmatmul.mubr.bf16.gmra.mxu0 %v187
    %v299 = vpop.f32.mrf.mxu0
    %v300 = vadd.f32 0.0, %v299
    %v301 = vpop.f32.mrf.mxu0
    %v302 = vpop.f32.mrf.mxu0
    %v303 = vadd.f32 0.0, %v302
    %v304 = vpop.f32.mrf.mxu0
    %305 = vmatprep.mubr.bf16.mxu0 0
    %306 = vmatmul.mubr.bf16.gmra.mxu0 %v188
    %v307 = vpop.f32.mrf.mxu0
    %v308 = vadd.f32 0.0, %v307
    %v309 = vpop.f32.mrf.mxu0
    %v310 = vpop.f32.mrf.mxu0
    %v311 = vadd.f32 0.0, %v310
    %v312 = vpop.f32.mrf.mxu0
    %313 = vmatprep.mubr.bf16.mxu0 0
    %314 = vmatmul.mubr.bf16.gmra.mxu0 %v189
    %v315 = vpop.f32.mrf.mxu0
    %v316 = vadd.f32 0.0, %v315
    %v317 = vpop.f32.mrf.mxu0
    %v318 = vpop.f32.mrf.mxu0
    %v319 = vadd.f32 0.0, %v318
    %v320 = vpop.f32.mrf.mxu0
    %321 = vmatprep.mubr.bf16.mxu0 0
    %322 = vmatmul.mubr.bf16.gmra.mxu0 %v190
    %v323 = vpop.f32.mrf.mxu0
    %v324 = vadd.f32 0.0, %v323
    %v325 = vpop.f32.mrf.mxu0
    %v326 = vpop.f32.mrf.mxu0
    %v327 = vadd.f32 0.0, %v326
    %v328 = vpop.f32.mrf.mxu0
    %329 = vmatprep.mubr.bf16.mxu0 0
    %330 = vmatmul.mubr.bf16.gmra.mxu0 %v191
    %v331 = vpop.f32.mrf.mxu0
    %v332 = vadd.f32 0.0, %v331
    %v333 = vpop.f32.mrf.mxu0
    %v334 = vpop.f32.mrf.mxu0
    %v335 = vadd.f32 0.0, %v334
    %v336 = vpop.f32.mrf.mxu0
    %337 = vmatprep.mubr.bf16.mxu0 0
    %338 = vmatmul.mubr.bf16.gmra.mxu0 %v192
    %v339 = vpop.f32.mrf.mxu0
    %v340 = vadd.f32 0.0, %v339
    %v341 = vpop.f32.mrf.mxu0
    %v342 = vpop.f32.mrf.mxu0
    %v343 = vadd.f32 0.0, %v342
    %v344 = vpop.f32.mrf.mxu0
    %345 = vdwg.mxu0
    %v346 = vadd.f32 %v105, %v284
    %v347 = vadd.f32 %v106, %v287
    %v348 = vadd.f32 %v107, %v292
    %v349 = vadd.f32 %v108, %v295
    %v350 = vadd.f32 %v109, %v300
    %v351 = vadd.f32 %v110, %v303
    %v352 = vadd.f32 %v111, %v308
    %v353 = vadd.f32 %v112, %v311
    %v354 = vadd.f32 %v113, %v316
    %v355 = vadd.f32 %v114, %v319
    %v356 = vadd.f32 %v115, %v324
    %v357 = vadd.f32 %v116, %v327
    %v358 = vadd.f32 %v117, %v332
    %v359 = vadd.f32 %v118, %v335
    %v360 = vadd.f32 %v119, %v340
    %v361 = vadd.f32 %v120, %v343
    %v362 = vpack.c.bf16 %v347, %v346
    %v363 = vpack.c.bf16 %v349, %v348
    %v364 = vpack.c.bf16 %v351, %v350
    %v365 = vpack.c.bf16 %v353, %v352
    %v366 = vpack.c.bf16 %v355, %v354
    %v367 = vpack.c.bf16 %v357, %v356
    %v368 = vpack.c.bf16 %v359, %v358
    %v369 = vpack.c.bf16 %v361, %v360
    %v370 = vld [vmem:[#allocation8] sm:$0xf]
    %v371 = vld [vmem:[#allocation8 + $0x4] sm:$0xf]
    %v372 = vld [vmem:[#allocation8 + $0x8] sm:$0xf]
    %v373 = vld [vmem:[#allocation8 + $0xc] sm:$0xf]
    %v374 = vld [vmem:[#allocation8 + $0x10] sm:$0xf]
    %v375 = vld [vmem:[#allocation8 + $0x14] sm:$0xf]
    %v376 = vld [vmem:[#allocation8 + $0x18] sm:$0xf]
    %v377 = vld [vmem:[#allocation8 + $0x1c] sm:$0xf]
    %v378 = vld [vmem:[#allocation8 + $0x20] sm:$0xf]
    %v379 = vld [vmem:[#allocation8 + $0x24] sm:$0xf]
    %v380 = vld [vmem:[#allocation8 + $0x28] sm:$0xf]
    %v381 = vld [vmem:[#allocation8 + $0x2c] sm:$0xf]
    %v382 = vld [vmem:[#allocation8 + $0x30] sm:$0xf]
    %v383 = vld [vmem:[#allocation8 + $0x34] sm:$0xf]
    %v384 = vld [vmem:[#allocation8 + $0x38] sm:$0xf]
    %v385 = vld [vmem:[#allocation8 + $0x3c] sm:$0xf]
    %v386 = vld [vmem:[%s4] sm:$0x1]
    %v388 = vlaneseq
    %v389 = vshrl.u32 %v388, 7
    %v390 = vsub.s32 0, %v389
    %v391 = vrot.slane %v386, %v390
    %v409 = vunpack.c.l.b16 %v370
    %v410 = vunpack.c.l.b16 %v371
    %v411 = vunpack.c.l.b16 %v372
    %v412 = vunpack.c.l.b16 %v373
    %v413 = vunpack.c.l.b16 %v374
    %v414 = vunpack.c.l.b16 %v375
    %v415 = vunpack.c.l.b16 %v376
    %v416 = vunpack.c.l.b16 %v377
    %v417 = vunpack.c.l.b16 %v378
    %v418 = vunpack.c.l.b16 %v379
    %v419 = vunpack.c.l.b16 %v380
    %v420 = vunpack.c.l.b16 %v381
    %v421 = vunpack.c.l.b16 %v382
    %v422 = vunpack.c.l.b16 %v383
    %v423 = vunpack.c.l.b16 %v384
    %v424 = vunpack.c.l.b16 %v385
    %v425 = vpack.c.b16 %v410, %v409
    %v426 = vpack.c.b16 %v412, %v411
    %v427 = vpack.c.b16 %v414, %v413
    %v428 = vpack.c.b16 %v416, %v415
    %v429 = vpack.c.b16 %v418, %v417
    %v430 = vpack.c.b16 %v420, %v419
    %v431 = vpack.c.b16 %v422, %v421
    %v432 = vpack.c.b16 %v424, %v423
    %441 = vmatprep.subr.bf16.mxu0 0
    %442 = vmatpush1.bf16.msra.mxu0 %v432
    %443 = vmatprep.subr.bf16.mxu0 0
    %444 = vmatpush1.bf16.msra.mxu0 %v431
    %445 = vmatprep.subr.bf16.mxu0 0
    %446 = vmatpush1.bf16.msra.mxu0 %v430
    %447 = vmatprep.subr.bf16.mxu0 0
    %448 = vmatpush1.bf16.msra.mxu0 %v429
    %449 = vmatprep.subr.bf16.mxu0 0
    %450 = vmatpush1.bf16.msra.mxu0 %v428
    %451 = vmatprep.subr.bf16.mxu0 0
    %452 = vmatpush1.bf16.msra.mxu0 %v427
    %453 = vmatprep.subr.bf16.mxu0 0
    %454 = vmatpush1.bf16.msra.mxu0 %v426
    %455 = vmatprep.subr.bf16.mxu0 0
    %456 = vmatpush1.bf16.msra.mxu0 %v425
    %457 = vmatprep.subr.bf16.mxu0 0
    %458 = vmatpush2.bf16.msra.mxu0 0
    %459 = vmatprep.subr.bf16.mxu0 0
    %460 = vmatpush2.bf16.msra.mxu0 0
    %461 = vmatprep.subr.bf16.mxu0 0
    %462 = vmatpush2.bf16.msra.mxu0 0
    %463 = vmatprep.subr.bf16.mxu0 0
    %464 = vmatpush2.bf16.msra.mxu0 0
    %465 = vmatprep.subr.bf16.mxu0 0
    %466 = vmatpush2.bf16.msra.mxu0 0
    %467 = vmatprep.subr.bf16.mxu0 0
    %468 = vmatpush2.bf16.msra.mxu0 0
    %469 = vmatprep.subr.bf16.mxu0 0
    %470 = vmatpush2.bf16.msra.mxu0 0
    %471 = vmatprep.subr.bf16.mxu0 0
    %472 = vmatpush2.bf16.msra.mxu0 0
    %473 = vmatprep.mubr.bf16.mxu0 0
    %474 = vmatmul.mubr.bf16.gmra.mxu0 %v362
    %v475 = vpop.f32.mrf.mxu0
    %v476 = vadd.f32 %v391, %v475
    %v477 = vpop.f32.mrf.mxu0
    %v478 = vpop.f32.mrf.mxu0
    %v479 = vadd.f32 %v391, %v478
    %v480 = vpop.f32.mrf.mxu0
    %481 = vmatprep.mubr.bf16.mxu0 0
    %482 = vmatmul.mubr.bf16.gmra.mxu0 %v363
    %v483 = vpop.f32.mrf.mxu0
    %v484 = vadd.f32 %v391, %v483
    %v485 = vpop.f32.mrf.mxu0
    %v486 = vpop.f32.mrf.mxu0
    %v487 = vadd.f32 %v391, %v486
    %v488 = vpop.f32.mrf.mxu0
    %489 = vmatprep.mubr.bf16.mxu0 0
    %490 = vmatmul.mubr.bf16.gmra.mxu0 %v364
    %v491 = vpop.f32.mrf.mxu0
    %v492 = vadd.f32 %v391, %v491
    %v493 = vpop.f32.mrf.mxu0
    %v494 = vpop.f32.mrf.mxu0
    %v495 = vadd.f32 %v391, %v494
    %v496 = vpop.f32.mrf.mxu0
    %497 = vmatprep.mubr.bf16.mxu0 0
    %498 = vmatmul.mubr.bf16.gmra.mxu0 %v365
    %v499 = vpop.f32.mrf.mxu0
    %v500 = vadd.f32 %v391, %v499
    %v501 = vpop.f32.mrf.mxu0
    %v502 = vpop.f32.mrf.mxu0
    %v503 = vadd.f32 %v391, %v502
    %v504 = vpop.f32.mrf.mxu0
    %505 = vmatprep.mubr.bf16.mxu0 0
    %506 = vmatmul.mubr.bf16.gmra.mxu0 %v366
    %v507 = vpop.f32.mrf.mxu0
    %v508 = vadd.f32 %v391, %v507
    %v509 = vpop.f32.mrf.mxu0
    %v510 = vpop.f32.mrf.mxu0
    %v511 = vadd.f32 %v391, %v510
    %v512 = vpop.f32.mrf.mxu0
    %513 = vmatprep.mubr.bf16.mxu0 0
    %514 = vmatmul.mubr.bf16.gmra.mxu0 %v367
    %v515 = vpop.f32.mrf.mxu0
    %v516 = vadd.f32 %v391, %v515
    %v517 = vpop.f32.mrf.mxu0
    %v518 = vpop.f32.mrf.mxu0
    %v519 = vadd.f32 %v391, %v518
    %v520 = vpop.f32.mrf.mxu0
    %521 = vmatprep.mubr.bf16.mxu0 0
    %522 = vmatmul.mubr.bf16.gmra.mxu0 %v368
    %v523 = vpop.f32.mrf.mxu0
    %v524 = vadd.f32 %v391, %v523
    %v525 = vpop.f32.mrf.mxu0
    %v526 = vpop.f32.mrf.mxu0
    %v527 = vadd.f32 %v391, %v526
    %v528 = vpop.f32.mrf.mxu0
    %529 = vmatprep.mubr.bf16.mxu0 0
    %530 = vmatmul.mubr.bf16.gmra.mxu0 %v369
    %v531 = vpop.f32.mrf.mxu0
    %v532 = vadd.f32 %v391, %v531
    %v533 = vpop.f32.mrf.mxu0
    %v534 = vpop.f32.mrf.mxu0
    %v535 = vadd.f32 %v391, %v534
    %v536 = vpop.f32.mrf.mxu0
    %537 = vdwg.mxu0
    %v538 = vmax.f32 %v476, 0.0
    %v539 = vmax.f32 %v479, 0.0
    %v540 = vmax.f32 %v484, 0.0
    %v541 = vmax.f32 %v487, 0.0
    %v542 = vmax.f32 %v492, 0.0
    %v543 = vmax.f32 %v495, 0.0
    %v544 = vmax.f32 %v500, 0.0
    %v545 = vmax.f32 %v503, 0.0
    %v546 = vmax.f32 %v508, 0.0
    %v547 = vmax.f32 %v511, 0.0
    %v548 = vmax.f32 %v516, 0.0
    %v549 = vmax.f32 %v519, 0.0
    %v550 = vmax.f32 %v524, 0.0
    %v551 = vmax.f32 %v527, 0.0
    %v552 = vmax.f32 %v532, 0.0
    %v553 = vmax.f32 %v535, 0.0
    %v554 = vpack.c.bf16 %v539, %v538
    %v555 = vpack.c.bf16 %v541, %v540
    %v556 = vpack.c.bf16 %v543, %v542
    %v557 = vpack.c.bf16 %v545, %v544
    %v558 = vpack.c.bf16 %v547, %v546
    %v559 = vpack.c.bf16 %v549, %v548
    %v560 = vpack.c.bf16 %v551, %v550
    %v561 = vpack.c.bf16 %v553, %v552
    %v562 = vld [vmem:[#allocation10] sm:$0xf]
    %v563 = vld [vmem:[#allocation10 + $0x4] sm:$0xf]
    %v564 = vld [vmem:[#allocation10 + $0x8] sm:$0xf]
    %v565 = vld [vmem:[#allocation10 + $0xc] sm:$0xf]
    %v566 = vld [vmem:[#allocation10 + $0x10] sm:$0xf]
    %v567 = vld [vmem:[#allocation10 + $0x14] sm:$0xf]
    %v568 = vld [vmem:[#allocation10 + $0x18] sm:$0xf]
    %v569 = vld [vmem:[#allocation10 + $0x1c] sm:$0xf]
    %v570 = vld [vmem:[#allocation10 + $0x20] sm:$0xf]
    %v571 = vld [vmem:[#allocation10 + $0x24] sm:$0xf]
    %v572 = vld [vmem:[#allocation10 + $0x28] sm:$0xf]
    %v573 = vld [vmem:[#allocation10 + $0x2c] sm:$0xf]
    %v574 = vld [vmem:[#allocation10 + $0x30] sm:$0xf]
    %v575 = vld [vmem:[#allocation10 + $0x34] sm:$0xf]
    %v576 = vld [vmem:[#allocation10 + $0x38] sm:$0xf]
    %v577 = vld [vmem:[#allocation10 + $0x3c] sm:$0xf]
    %v578 = vld [vmem:[%s6] sm:$0x1]
    %v580 = vlaneseq
    %v581 = vshrl.u32 %v580, 7
    %v582 = vsub.s32 0, %v581
    %v583 = vrot.slane %v578, %v582
    %v601 = vunpack.c.l.b16 %v562
    %v602 = vunpack.c.l.b16 %v563
    %v603 = vunpack.c.l.b16 %v564
    %v604 = vunpack.c.l.b16 %v565
    %v605 = vunpack.c.l.b16 %v566
    %v606 = vunpack.c.l.b16 %v567
    %v607 = vunpack.c.l.b16 %v568
    %v608 = vunpack.c.l.b16 %v569
    %v609 = vunpack.c.l.b16 %v570
    %v610 = vunpack.c.l.b16 %v571
    %v611 = vunpack.c.l.b16 %v572
    %v612 = vunpack.c.l.b16 %v573
    %v613 = vunpack.c.l.b16 %v574
    %v614 = vunpack.c.l.b16 %v575
    %v615 = vunpack.c.l.b16 %v576
    %v616 = vunpack.c.l.b16 %v577
    %v617 = vpack.c.b16 %v602, %v601
    %v618 = vpack.c.b16 %v604, %v603
    %v619 = vpack.c.b16 %v606, %v605
    %v620 = vpack.c.b16 %v608, %v607
    %v621 = vpack.c.b16 %v610, %v609
    %v622 = vpack.c.b16 %v612, %v611
    %v623 = vpack.c.b16 %v614, %v613
    %v624 = vpack.c.b16 %v616, %v615
    %633 = vmatprep.subr.bf16.mxu0 0
    %634 = vmatpush1.bf16.msra.mxu0 %v624
    %635 = vmatprep.subr.bf16.mxu0 0
    %636 = vmatpush1.bf16.msra.mxu0 %v623
    %637 = vmatprep.subr.bf16.mxu0 0
    %638 = vmatpush1.bf16.msra.mxu0 %v622
    %639 = vmatprep.subr.bf16.mxu0 0
    %640 = vmatpush1.bf16.msra.mxu0 %v621
    %641 = vmatprep.subr.bf16.mxu0 0
    %642 = vmatpush1.bf16.msra.mxu0 %v620
    %643 = vmatprep.subr.bf16.mxu0 0
    %644 = vmatpush1.bf16.msra.mxu0 %v619
    %645 = vmatprep.subr.bf16.mxu0 0
    %646 = vmatpush1.bf16.msra.mxu0 %v618
    %647 = vmatprep.subr.bf16.mxu0 0
    %648 = vmatpush1.bf16.msra.mxu0 %v617
    %649 = vmatprep.subr.bf16.mxu0 0
    %650 = vmatpush2.bf16.msra.mxu0 0
    %651 = vmatprep.subr.bf16.mxu0 0
    %652 = vmatpush2.bf16.msra.mxu0 0
    %653 = vmatprep.subr.bf16.mxu0 0
    %654 = vmatpush2.bf16.msra.mxu0 0
    %655 = vmatprep.subr.bf16.mxu0 0
    %656 = vmatpush2.bf16.msra.mxu0 0
    %657 = vmatprep.subr.bf16.mxu0 0
    %658 = vmatpush2.bf16.msra.mxu0 0
    %659 = vmatprep.subr.bf16.mxu0 0
    %660 = vmatpush2.bf16.msra.mxu0 0
    %661 = vmatprep.subr.bf16.mxu0 0
    %662 = vmatpush2.bf16.msra.mxu0 0
    %663 = vmatprep.subr.bf16.mxu0 0
    %664 = vmatpush2.bf16.msra.mxu0 0
    %665 = vmatprep.mubr.bf16.mxu0 0
    %666 = vmatmul.mubr.bf16.gmra.mxu0 %v554
    %v667 = vpop.f32.mrf.mxu0
    %v668 = vadd.f32 %v583, %v667
    %v669 = vpop.f32.mrf.mxu0
    %v670 = vpop.f32.mrf.mxu0
    %v671 = vadd.f32 %v583, %v670
    %v672 = vpop.f32.mrf.mxu0
    %673 = vmatprep.mubr.bf16.mxu0 0
    %674 = vmatmul.mubr.bf16.gmra.mxu0 %v555
    %v675 = vpop.f32.mrf.mxu0
    %v676 = vadd.f32 %v583, %v675
    %v677 = vpop.f32.mrf.mxu0
    %v678 = vpop.f32.mrf.mxu0
    %v679 = vadd.f32 %v583, %v678
    %v680 = vpop.f32.mrf.mxu0
    %681 = vmatprep.mubr.bf16.mxu0 0
    %682 = vmatmul.mubr.bf16.gmra.mxu0 %v556
    %v683 = vpop.f32.mrf.mxu0
    %v684 = vadd.f32 %v583, %v683
    %v685 = vpop.f32.mrf.mxu0
    %v686 = vpop.f32.mrf.mxu0
    %v687 = vadd.f32 %v583, %v686
    %v688 = vpop.f32.mrf.mxu0
    %689 = vmatprep.mubr.bf16.mxu0 0
    %690 = vmatmul.mubr.bf16.gmra.mxu0 %v557
    %v691 = vpop.f32.mrf.mxu0
    %v692 = vadd.f32 %v583, %v691
    %v693 = vpop.f32.mrf.mxu0
    %v694 = vpop.f32.mrf.mxu0
    %v695 = vadd.f32 %v583, %v694
    %v696 = vpop.f32.mrf.mxu0
    %697 = vmatprep.mubr.bf16.mxu0 0
    %698 = vmatmul.mubr.bf16.gmra.mxu0 %v558
    %v699 = vpop.f32.mrf.mxu0
    %v700 = vadd.f32 %v583, %v699
    %v701 = vpop.f32.mrf.mxu0
    %v702 = vpop.f32.mrf.mxu0
    %v703 = vadd.f32 %v583, %v702
    %v704 = vpop.f32.mrf.mxu0
    %705 = vmatprep.mubr.bf16.mxu0 0
    %706 = vmatmul.mubr.bf16.gmra.mxu0 %v559
    %v707 = vpop.f32.mrf.mxu0
    %v708 = vadd.f32 %v583, %v707
    %v709 = vpop.f32.mrf.mxu0
    %v710 = vpop.f32.mrf.mxu0
    %v711 = vadd.f32 %v583, %v710
    %v712 = vpop.f32.mrf.mxu0
    %713 = vmatprep.mubr.bf16.mxu0 0
    %714 = vmatmul.mubr.bf16.gmra.mxu0 %v560
    %v715 = vpop.f32.mrf.mxu0
    %v716 = vadd.f32 %v583, %v715
    %v717 = vpop.f32.mrf.mxu0
    %v718 = vpop.f32.mrf.mxu0
    %v719 = vadd.f32 %v583, %v718
    %v720 = vpop.f32.mrf.mxu0
    %721 = vmatprep.mubr.bf16.mxu0 0
    %722 = vmatmul.mubr.bf16.gmra.mxu0 %v561
    %v723 = vpop.f32.mrf.mxu0
    %v724 = vadd.f32 %v583, %v723
    %v725 = vpop.f32.mrf.mxu0
    %v726 = vpop.f32.mrf.mxu0
    %v727 = vadd.f32 %v583, %v726
    %v728 = vpop.f32.mrf.mxu0
    %729 = vdwg.mxu0
    %730 = vst [vmem:[#allocation11] sm:$0xff] %v668
    %731 = vst [vmem:[#allocation11 + $0x8] sm:$0xff] %v671
    %732 = vst [vmem:[#allocation11 + $0x10] sm:$0xff] %v676
    %733 = vst [vmem:[#allocation11 + $0x18] sm:$0xff] %v679
    %734 = vst [vmem:[#allocation11 + $0x20] sm:$0xff] %v684
    %735 = vst [vmem:[#allocation11 + $0x28] sm:$0xff] %v687
    %736 = vst [vmem:[#allocation11 + $0x30] sm:$0xff] %v692
    %737 = vst [vmem:[#allocation11 + $0x38] sm:$0xff] %v695
    %738 = vst [vmem:[#allocation11 + $0x40] sm:$0xff] %v700
    %739 = vst [vmem:[#allocation11 + $0x48] sm:$0xff] %v703
    %740 = vst [vmem:[#allocation11 + $0x50] sm:$0xff] %v708
    %741 = vst [vmem:[#allocation11 + $0x58] sm:$0xff] %v711
    %742 = vst [vmem:[#allocation11 + $0x60] sm:$0xff] %v716
    %743 = vst [vmem:[#allocation11 + $0x68] sm:$0xff] %v719
    %744 = vst [vmem:[#allocation11 + $0x70] sm:$0xff] %v724
    %745 = vst [vmem:[#allocation11 + $0x78] sm:$0xff] %v727
    %v746 = vld [vmem:[%s7] sm:$0x1]
    %v748 = vlaneseq
    %v749 = vshrl.u32 %v748, 7
    %v750 = vsub.s32 0, %v749
    %v751 = vrot.slane %v746, %v750
    %v753 = vmul.f32 %v668, %v751
    %v754 = vmul.f32 %v671, %v751
    %v755 = vmul.f32 %v676, %v751
    %v756 = vmul.f32 %v679, %v751
    %v757 = vmul.f32 %v684, %v751
    %v758 = vmul.f32 %v687, %v751
    %v759 = vmul.f32 %v692, %v751
    %v760 = vmul.f32 %v695, %v751
    %v761 = vmul.f32 %v700, %v751
    %v762 = vmul.f32 %v703, %v751
    %v763 = vmul.f32 %v708, %v751
    %v764 = vmul.f32 %v711, %v751
    %v765 = vmul.f32 %v716, %v751
    %v766 = vmul.f32 %v719, %v751
    %v767 = vmul.f32 %v724, %v751
    %v768 = vmul.f32 %v727, %v751
    %v769 = vld [vmem:[%s8] sm:$0x1]
    %v771 = vlaneseq
    %v772 = vshrl.u32 %v771, 7
    %v773 = vsub.s32 0, %v772
    %v774 = vrot.slane %v769, %v773
    %v776 = vadd.f32 %v753, %v774
    %v777 = vadd.f32 %v754, %v774
    %v778 = vadd.f32 %v755, %v774
    %v779 = vadd.f32 %v756, %v774
    %v780 = vadd.f32 %v757, %v774
    %v781 = vadd.f32 %v758, %v774
    %v782 = vadd.f32 %v759, %v774
    %v783 = vadd.f32 %v760, %v774
    %v784 = vadd.f32 %v761, %v774
    %v785 = vadd.f32 %v762, %v774
    %v786 = vadd.f32 %v763, %v774
    %v787 = vadd.f32 %v764, %v774
    %v788 = vadd.f32 %v765, %v774
    %v789 = vadd.f32 %v766, %v774
    %v790 = vadd.f32 %v767, %v774
    %v791 = vadd.f32 %v768, %v774
    %v792 = vmax.f32 %v776, 0.0
    %v793 = vmax.f32 %v777, 0.0
    %v794 = vmax.f32 %v778, 0.0
    %v795 = vmax.f32 %v779, 0.0
    %v796 = vmax.f32 %v780, 0.0
    %v797 = vmax.f32 %v781, 0.0
    %v798 = vmax.f32 %v782, 0.0
    %v799 = vmax.f32 %v783, 0.0
    %v800 = vmax.f32 %v784, 0.0
    %v801 = vmax.f32 %v785, 0.0
    %v802 = vmax.f32 %v786, 0.0
    %v803 = vmax.f32 %v787, 0.0
    %v804 = vmax.f32 %v788, 0.0
    %v805 = vmax.f32 %v789, 0.0
    %v806 = vmax.f32 %v790, 0.0
    %v807 = vmax.f32 %v791, 0.0
    %v808 = vpack.c.bf16 %v793, %v792
    %v809 = vpack.c.bf16 %v795, %v794
    %v810 = vpack.c.bf16 %v797, %v796
    %v811 = vpack.c.bf16 %v799, %v798
    %v812 = vpack.c.bf16 %v801, %v800
    %v813 = vpack.c.bf16 %v803, %v802
    %v814 = vpack.c.bf16 %v805, %v804
    %v815 = vpack.c.bf16 %v807, %v806
    %v824 = vunpack.c.l.b16 %v808
    %v825 = vunpack.c.h.b16 %v808
    %v826 = vunpack.c.l.b16 %v809
    %v827 = vunpack.c.h.b16 %v809
    %v828 = vunpack.c.l.b16 %v810
    %v829 = vunpack.c.h.b16 %v810
    %v830 = vunpack.c.l.b16 %v811
    %v831 = vunpack.c.h.b16 %v811
    %v832 = vunpack.c.l.b16 %v812
    %v833 = vunpack.c.h.b16 %v812
    %v834 = vunpack.c.l.b16 %v813
    %v835 = vunpack.c.h.b16 %v813
    %v836 = vunpack.c.l.b16 %v814
    %v837 = vunpack.c.h.b16 %v814
    %v838 = vunpack.c.l.b16 %v815
    %v839 = vunpack.c.h.b16 %v815
    %v840 = vpack.c.b16 %v824, %v824
    %v841 = vpack.c.b16 %v825, %v825
    %v842 = vpack.c.b16 %v826, %v826
    %v843 = vpack.c.b16 %v827, %v827
    %v844 = vpack.c.b16 %v828, %v828
    %v845 = vpack.c.b16 %v829, %v829
    %v846 = vpack.c.b16 %v830, %v830
    %v847 = vpack.c.b16 %v831, %v831
    %v848 = vpack.c.b16 %v832, %v832
    %v849 = vpack.c.b16 %v833, %v833
    %v850 = vpack.c.b16 %v834, %v834
    %v851 = vpack.c.b16 %v835, %v835
    %v852 = vpack.c.b16 %v836, %v836
    %v853 = vpack.c.b16 %v837, %v837
    %v854 = vpack.c.b16 %v838, %v838
    %v855 = vpack.c.b16 %v839, %v839
    %872 = vst [vmem:[#allocation12] sm:$0xf] %v840
    %873 = vst [vmem:[#allocation12 + $0x4] sm:$0xf] %v841
    %874 = vst [vmem:[#allocation12 + $0x8] sm:$0xf] %v842
    %875 = vst [vmem:[#allocation12 + $0xc] sm:$0xf] %v843
    %876 = vst [vmem:[#allocation12 + $0x10] sm:$0xf] %v844
    %877 = vst [vmem:[#allocation12 + $0x14] sm:$0xf] %v845
    %878 = vst [vmem:[#allocation12 + $0x18] sm:$0xf] %v846
    %879 = vst [vmem:[#allocation12 + $0x1c] sm:$0xf] %v847
    %880 = vst [vmem:[#allocation12 + $0x20] sm:$0xf] %v848
    %881 = vst [vmem:[#allocation12 + $0x24] sm:$0xf] %v849
    %882 = vst [vmem:[#allocation12 + $0x28] sm:$0xf] %v850
    %883 = vst [vmem:[#allocation12 + $0x2c] sm:$0xf] %v851
    %884 = vst [vmem:[#allocation12 + $0x30] sm:$0xf] %v852
    %885 = vst [vmem:[#allocation12 + $0x34] sm:$0xf] %v853
    %886 = vst [vmem:[#allocation12 + $0x38] sm:$0xf] %v854
    %887 = vst [vmem:[#allocation12 + $0x3c] sm:$0xf] %v855
    // Predicated region
    $region58: #{tpu_custom_call.1} parent=1 // pred_check
      _
    $region59: #{tpu_custom_call.1} parent=1 // pred_check_branch
      %889 = sbr.rel (0) target = $region61
    $region60: #{tpu_custom_call.1} parent=1 // pred_region
      %s891 = ssub.s32 2048, 2048
      %892 = vsyncadd [#allocation4], %s891
      %s893 = sshll.u32 [#allocation11], 4
      %s894 = int_to_ptr.vmem [resolvable:$true] %s893
      %899 = dma.vmem_to_hbm [thread:$0]  %s894, 2048, %s9, [#allocation4], 128, 128, 8
    $region61: #{tpu_custom_call.1} parent=1 // pred_fallthru
      _
    // Predicated region
    $region62: #{tpu_custom_call.1} parent=1 // pred_check
      _
    $region63: #{tpu_custom_call.1} parent=1 // pred_check_branch
      %901 = sbr.rel (0) target = $region65
    $region64: #{tpu_custom_call.1} parent=1 // pred_region
      %s903 = ssub.s32 1024, 1024
      %904 = vsyncadd [#allocation13], %s903
      %s905 = sshll.u32 [#allocation12], 4
      %s906 = int_to_ptr.vmem [resolvable:$true] %s905
      %911 = dma.vmem_to_hbm [thread:$0]  %s906, 1024, %s10, [#allocation13], 64, 64, 4
    $region65: #{tpu_custom_call.1} parent=1 // pred_fallthru
      _
    // Predicated region
    $region66: #{tpu_custom_call.1} parent=1 // pred_check
      _
    $region67: #{tpu_custom_call.1} parent=1 // pred_check_branch
      %913 = sbr.rel (0) target = $region69
    $region68: #{tpu_custom_call.1} parent=1 // pred_region
      %914 = dma.done [#allocation4], 2048
    $region69: #{tpu_custom_call.1} parent=1 // pred_fallthru
      _
    // Predicated region
    $region70: #{tpu_custom_call.1} parent=1 // pred_check
      _
    $region71: #{tpu_custom_call.1} parent=1 // pred_check_branch
      %916 = sbr.rel (0) target = $region73
    $region72: #{tpu_custom_call.1} parent=1 // pred_region
      %917 = dma.done [#allocation13], 1024
    $region73: #{tpu_custom_call.1} parent=1 // pred_fallthru
      _
    %918 = vsyncpa [#allocation3], 1
    %919 = vsyncpa [#allocation6], 1
    %920 = vsyncpa [#allocation9], 1
    %921 = vsyncpa [#allocation4], 1
    %922 = vsyncpa [#allocation13], 1

</llo_original>
